<compile_context>
chip_gen: v6e
topology: v6e:2x2x1
jax: 0.10.0
libtpu: 0.0.40
codegen_flags: <defaults>
</compile_context>

<pallas_src>
import jax
import jax.numpy as jnp
from jax import lax
from jax.experimental import pallas as pl
from jax.experimental.pallas import tpu as pltpu


def _make_mlp_kernel(compute_dtype):
    def _mlp_kernel(x_ref, w_ref, b_ref, o_ref):
        # x_ref: (C, t_hw)     tile of the (B, C, HW) input (batch squeezed)
        # w_ref: (C, E_pad)    transposed weight, resident across the grid
        # b_ref: (1, E_pad)    bias (f32)
        # o_ref: (t_hw, E_pad) output tile (lane-dense, E_pad % 128 == 0)
        x = x_ref[...]
        if compute_dtype is not None and x.dtype != compute_dtype:
            x = x.astype(compute_dtype)           # cast on-chip, not in HBM
        acc = lax.dot_general(
            x, w_ref[...],
            dimension_numbers=(((0,), (0,)), ((), ())),  # contract C: x^T @ W
            preferred_element_type=jnp.float32,          # f32 MXU accumulate
        )
        o_ref[...] = (acc + b_ref[...]).astype(o_ref.dtype)

    return _mlp_kernel


def _choose_hw_tile(hw, tm, c, e_pad, x_itemsize, w_itemsize, out_itemsize,
                    vmem_budget=28 * 1024 * 1024):
    """Largest multiple of 128 <= min(tm, hw) that divides hw and fits the
    VMEM budget (double-buffered x & out tiles + resident weight/bias).
    Falls back to the full extent (always a legal block) if none qualifies."""
    fixed = 2 * c * e_pad * w_itemsize + 2 * e_pad * 4   # weight + bias bufs

    def fits(t):
        tile = 2 * c * t * x_itemsize + 2 * t * e_pad * out_itemsize
        return fixed + tile <= vmem_budget

    cap = min(tm, hw)
    t = cap - cap % 128
    while t >= 128:
        if hw % t == 0 and fits(t):
            return t
        t -= 128
    return hw


def mlp_forward(x_nchw, weight, bias, *, tm=1024,
                compute_dtype=jnp.bfloat16, out_dtype=None):
    """SegFormer MLP forward.

    x_nchw : (B, C, H, W)
    weight : (E, C)   -- PyTorch nn.Linear convention (out_features, in_features)
    bias   : (E,)
    returns: (B, H*W, E) in `out_dtype` (defaults to x's dtype)
    """
    B, C, H, W = x_nchw.shape
    E = weight.shape[0]
    HW = H * W
    if out_dtype is None:
        out_dtype = x_nchw.dtype

    # Keep the output last dim lane-dense: pad E up to a multiple of 128.
    E_pad = ((E + 127) // 128) * 128

    # Free reshape (contiguous) -- NO HBM transpose pass, NO wrapper-side cast
    # of x (the cast happens on the VMEM tile inside the kernel).
    x_hw = x_nchw.reshape(B, C, HW)

    w_dtype = compute_dtype if compute_dtype is not None else x_nchw.dtype
    w_t = weight.T.astype(w_dtype)                 # (C, E), one-shot tiny op
    b_f32 = bias.astype(jnp.float32)
    if E_pad != E:
        w_t = jnp.pad(w_t, ((0, 0), (0, E_pad - E)))
        b_f32 = jnp.pad(b_f32, (0, E_pad - E))
    b2d = b_f32.reshape(1, E_pad)

    t_hw = _choose_hw_tile(
        HW, tm, C, E_pad,
        x_itemsize=jnp.dtype(x_hw.dtype).itemsize,
        w_itemsize=jnp.dtype(w_t.dtype).itemsize,
        out_itemsize=jnp.dtype(out_dtype).itemsize,
    )
    grid = (B, HW // t_hw)   # both axes independent -> megacore-shardable

    out = pl.pallas_call(
        _make_mlp_kernel(compute_dtype),
        out_shape=jax.ShapeDtypeStruct((B, HW, E_pad), out_dtype),
        grid_spec=pltpu.PrefetchScalarGridSpec(
            num_scalar_prefetch=0,
            grid=grid,
            in_specs=[
                # (C, t_hw) tile of x, batch dim squeezed out of the kernel ref.
                pl.BlockSpec((None, C, t_hw), lambda b, j: (b, 0, j)),
                # Weight & bias: constant block index -> stay resident in VMEM,
                # Pallas skips the re-DMA on every step after the first.
                pl.BlockSpec((C, E_pad), lambda b, j: (0, 0)),
                pl.BlockSpec((1, E_pad), lambda b, j: (0, 0)),
            ],
            out_specs=pl.BlockSpec((None, t_hw, E_pad), lambda b, j: (b, j, 0)),
        ),
        compiler_params=pltpu.CompilerParams(
            dimension_semantics=("parallel", "parallel"),
        ),
    )(x_hw, w_t, b2d)

    if E_pad != E:
        out = out[:, :, :E]
    return out


if __name__ == "__main__":
    # Small, deterministic shapes consistent with the module:
    # input_dim (C) = 32, embed_dim (E) = 128, spatial 16x16, batch 2.
    B, C, H, W = 2, 32, 16, 16
    E = 128

    key = jax.random.PRNGKey(0)
    kx, kw, kb = jax.random.split(key, 3)

    x = jax.random.normal(kx, (B, C, H, W), dtype=jnp.float32)
    weight = jax.random.normal(kw, (E, C), dtype=jnp.float32) * 0.02
    bias = jax.random.normal(kb, (E,), dtype=jnp.float32) * 0.02

    out = jax.block_until_ready(mlp_forward(x, weight, bias))

    # Reference (plain JAX, same math as the PyTorch forward), high precision.
    x_tok = jnp.transpose(x.reshape(B, C, H * W), (0, 2, 1))
    ref = jnp.einsum("btc,ec->bte", x_tok, weight,
                     precision=jax.lax.Precision.HIGHEST) + bias

    assert out.shape == (B, H * W, E)
    assert out.dtype == x.dtype
    max_err = float(jnp.max(jnp.abs(out.astype(jnp.float32) - ref)))
    # bf16 inputs with f32 accumulation: errors stay well under this bound.
    assert max_err < 2e-2, f"max abs error {max_err}"

    print("KERNEL_OK")
</pallas_src>

<mosaic_0001>
module attributes {stable_mosaic.version = 11 : i64} {
  func.func @_mlp_kernel(%arg0: i32, %arg1: i32, %arg2: memref<1x32x256xf32, #tpu.memory_space<vmem>>, %arg3: memref<32x128xbf16, #tpu.memory_space<vmem>>, %arg4: memref<1x128xf32, #tpu.memory_space<vmem>>, %arg5: memref<1x256x128xf32, #tpu.memory_space<vmem>>) attributes {dimension_semantics = [#tpu.dimension_semantics<parallel>, #tpu.dimension_semantics<parallel>], iteration_bounds = array<i64: 2, 1>, scalar_prefetch = 0 : i64, scratch_operands = 0 : i64, tpu.core_type = #tpu.core_type<tc>, window_params = [{transform_indices = @transform_0, window_bounds = array<i64: 1, 32, 256>}, {pipeline_mode = #tpu.pipeline_mode<synchronous>, transform_indices = @transform_1, window_bounds = array<i64: 32, 128>}, {pipeline_mode = #tpu.pipeline_mode<synchronous>, transform_indices = @transform_2, window_bounds = array<i64: 1, 128>}, {transform_indices = @transform_3, window_bounds = array<i64: 1, 256, 128>}]} {
    %c0 = arith.constant 0 : index
    %c0_0 = arith.constant 0 : index
    %c0_1 = arith.constant 0 : index
    %0 = vector.load %arg2[%c0, %c0_0, %c0_1] : memref<1x32x256xf32, #tpu.memory_space<vmem>>, vector<1x32x256xf32>
    %1 = vector.shape_cast %0 : vector<1x32x256xf32> to vector<32x256xf32>
    %2 = arith.truncf %1 : vector<32x256xf32> to vector<32x256xbf16>
    %c0_2 = arith.constant 0 : index
    %c0_3 = arith.constant 0 : index
    %3 = vector.load %arg3[%c0_2, %c0_3] : memref<32x128xbf16, #tpu.memory_space<vmem>>, vector<32x128xbf16>
    %cst = arith.constant dense<0.000000e+00> : vector<256x128xf32>
    %4 = tpu.matmul %2, %3, %cst {dimension_numbers = #tpu.dot_dimension_numbers<[0], [0], [1], [1], [0, 1, 1, 1], [], []>} : vector<32x256xbf16>, vector<32x128xbf16>, vector<256x128xf32> -> vector<256x128xf32>
    %c0_4 = arith.constant 0 : index
    %c0_5 = arith.constant 0 : index
    %5 = vector.load %arg4[%c0_4, %c0_5] : memref<1x128xf32, #tpu.memory_space<vmem>>, vector<1x128xf32>
    %6 = vector.broadcast %5 : vector<1x128xf32> to vector<256x128xf32>
    %7 = arith.addf %4, %6 : vector<256x128xf32>
    %c0_6 = arith.constant 0 : index
    %c0_7 = arith.constant 0 : index
    %c0_8 = arith.constant 0 : index
    %8 = vector.load %arg5[%c0_6, %c0_7, %c0_8] : memref<1x256x128xf32, #tpu.memory_space<vmem>>, vector<1x256x128xf32>
    %9 = vector.shape_cast %8 : vector<1x256x128xf32> to vector<256x128xf32>
    %10 = vector.shape_cast %7 : vector<256x128xf32> to vector<1x256x128xf32>
    tpu.vector_store %arg5[%c0_6, %c0_7, %c0_8], %10 {strides = array<i32>} : memref<1x256x128xf32, #tpu.memory_space<vmem>>, vector<1x256x128xf32>,
    return
  }
  func.func @transform_0(%arg0: i32, %arg1: i32) -> (i32, i32, i32) {
    %c0_i32 = arith.constant 0 : i32
    %c0_i32_0 = arith.constant 0 : i32
    return %arg0, %c0_i32, %arg1 : i32, i32, i32
  }
  func.func @transform_1(%arg0: i32, %arg1: i32) -> (i32, i32) {
    %c0_i32 = arith.constant 0 : i32
    %c0_i32_0 = arith.constant 0 : i32
    %c0_i32_1 = arith.constant 0 : i32
    return %c0_i32, %c0_i32_0 : i32, i32
  }
  func.func @transform_2(%arg0: i32, %arg1: i32) -> (i32, i32) {
    %c0_i32 = arith.constant 0 : i32
    %c0_i32_0 = arith.constant 0 : i32
    %c0_i32_1 = arith.constant 0 : i32
    return %c0_i32, %c0_i32_0 : i32, i32
  }
  func.func @transform_3(%arg0: i32, %arg1: i32) -> (i32, i32, i32) {
    %c0_i32 = arith.constant 0 : i32
    %c0_i32_0 = arith.constant 0 : i32
    return %arg0, %arg1, %c0_i32 : i32, i32, i32
  }
}

</mosaic_0001>

<llo_original>
// kernel: tpu_custom_call.1
$region0: #{tpu_custom_call.1}
  #allocation0 [shape = 'u32[]', space=smem, size = 0x4, offset = 0x4, fixed_abs, tag = 'smem constant byte address 0x4 - core index']
  #allocation1 [shape = 'u32[144,128]{1,0:T(1,128)}', space=vmem, size = 0x12000, scoped, tag = 'internal scratch']
  %s0 = inlined_call_operand.hbm [shape: f32[2,32,256], index: 0, kind: input, shape index: {}]
  %s1 = inlined_call_operand.hbm [shape: bf16[32,128], index: 1, kind: input, shape index: {}]
  %s2 = inlined_call_operand.vmem [shape: f32[1,128], index: 2, kind: input, shape index: {}]
  %s3 = inlined_call_operand.hbm [shape: f32[2,256,128], index: 3, kind: output, shape index: {}]
  %s4 = sld [smem:[#allocation0]]
  $region53: #{tpu_custom_call.1} parent=0
    _
  %s6 = ssub.s32 1, %s4
  %s7 = scalar_select 0, %s6, %s4
  $region1: #{tpu_custom_call.1} parent=0
    #allocation2 [shape = 'u8[65536]{0}', space=vmem, size = 0x10000, scoped, tag = 'input window, operand 0']
    #allocation3 [shape = 's32[2]{0}', space=sflag, size = 0x8, scoped, tag = 'scoped memory for tpu_custom_call.1']
    #allocation4 [shape = 's32[2]{0}', space=sflag, size = 0x8, scoped, tag = 'scoped memory for tpu_custom_call.1']
    #allocation5 [shape = 'u8[8192]{0}', space=vmem, size = 0x2000, scoped, tag = 'input window, operand 1, single buffered']
    #allocation6 [shape = 's32[1]{0}', space=sflag, size = 0x4, scoped, tag = 'scoped memory for tpu_custom_call.1']
    #allocation7 [shape = 'u8[262144]{0}', space=vmem, size = 0x40000, scoped, tag = 'output window, operand 0']
    %8 = vsyncpa [#allocation3], 0
    %s9 = scalar_lea.sflag [#allocation3], 1
    %10 = vsyncpa %s9, 0
    %11 = vsyncpa [#allocation6], 0
    %12 = vsyncpa [#allocation4], 0
    %s13 = scalar_lea.sflag [#allocation4], 1
    %14 = vsyncpa %s13, 0
    loop: start=0, step=1, limit=4
    $region2: #{tpu_custom_call.1} parent=1 // loop_pre_header
      _
    $region3: #{tpu_custom_call.1} parent=1 // loop_header
      %s16 = sphi 0, %s20
      %p17 = scmp.ge.s32.totalorder %s16, 4
      %s23 = sphi 0, %s35
      %s24 = sphi 0, %s31
      %s25 = sphi 0, %s23
      %s26 = sphi 0, %s24
      %s27 = sphi 0, %s25
      %s28 = sphi 0, %s26
      %s40 = sphi 0, %s42
      %s43 = sphi 0, %s40
      %s44 = sphi 0, %s43
      %s60 = sphi 0, %s44
      %s64 = sphi 0, %s64
      %s66 = sphi 0, %s64
      %s67 = sphi 0, %s66
      %s81 = sphi 0, %s67
      %s85 = sphi 0, %s85
      %s87 = sphi 0, %s85
      %s88 = sphi 0, %s87
      %s102 = sphi 0, %s88
      %s110 = sphi 0, %s112
      %s113 = sphi 0, %s110
      %s114 = sphi 0, %s113
      %s130 = sphi 0, %s114
    $region4: #{tpu_custom_call.1} parent=1 // loop_header_branch
      %19 = sbr.rel (%p17) target = $region8
    $region5: #{tpu_custom_call.1} parent=1 // loop_body
      %s21 = ssub.s32 %s16, 1
      %s22 = ssub.s32 %s16, 2
      %s29 = sadd.s32 1, %s24
      %p30 = scmp.ge.s32.totalorder %s29, 1
      %s31 = scalar_select %p30, 0, %s29
      %s32 = sadd.s32 1, %s23
      %s33 = scalar_select %p30, %s32, %s23
      %p34 = scmp.ge.s32.totalorder %s33, 2
      %s35 = scalar_select %p34, 0, %s33
      %s36 = ssub.s32 %s23, %s35
      %s37 = ssub.s32 %s24, %s31
      %s38 = sor.u32 %s36, %s37
      %p39 = scmp.eq.s32.totalorder %s38, 0
      %s41 = sadd.s32 %s40, 1
      %s42 = scalar_select %p39, %s40, %s41
      %p45 = pneg %p39
      %p46 = scmp.eq.s32.totalorder %s16, 1
      %p47 = por %p45, %p46
      %p48 = scmp.ne.s32.totalorder %s40, %s43
      %p49 = scmp.eq.s32.totalorder %s16, 0
      %p50 = por %p48, %p49
      %p51 = scmp.ne.s32.totalorder %s40, %s43
      %p52 = scmp.eq.s32.totalorder %s21, 1
      %p53 = por %p51, %p52
      %p54 = scmp.ne.s32.totalorder %s43, %s44
      %p55 = scmp.eq.s32.totalorder %s21, 0
      %p56 = por %p54, %p55
      %p57 = scmp.ne.s32.totalorder %s43, %s44
      %p58 = scmp.eq.s32.totalorder %s22, 1
      %p59 = por %p57, %p58
      %p61 = scmp.ne.s32.totalorder %s44, %s60
      %p62 = scmp.eq.s32.totalorder %s22, 0
      %p63 = por %p61, %p62
      %s65 = sadd.s32 %s64, 1
      %p68 = scmp.eq.s32.totalorder %s16, 1
      %p69 = scmp.ne.s32.totalorder %s64, %s66
      %p70 = scmp.eq.s32.totalorder %s16, 0
      %p71 = por %p69, %p70
      %p72 = scmp.ne.s32.totalorder %s64, %s66
      %p73 = scmp.eq.s32.totalorder %s21, 1
      %p74 = por %p72, %p73
      %p75 = scmp.ne.s32.totalorder %s66, %s67
      %p76 = scmp.eq.s32.totalorder %s21, 0
      %p77 = por %p75, %p76
      %p78 = scmp.ne.s32.totalorder %s66, %s67
      %p79 = scmp.eq.s32.totalorder %s22, 1
      %p80 = por %p78, %p79
      %p82 = scmp.ne.s32.totalorder %s67, %s81
      %p83 = scmp.eq.s32.totalorder %s22, 0
      %p84 = por %p82, %p83
      %s86 = sadd.s32 %s85, 1
      %p89 = scmp.eq.s32.totalorder %s16, 1
      %p90 = scmp.ne.s32.totalorder %s85, %s87
      %p91 = scmp.eq.s32.totalorder %s16, 0
      %p92 = por %p90, %p91
      %p93 = scmp.ne.s32.totalorder %s85, %s87
      %p94 = scmp.eq.s32.totalorder %s21, 1
      %p95 = por %p93, %p94
      %p96 = scmp.ne.s32.totalorder %s87, %s88
      %p97 = scmp.eq.s32.totalorder %s21, 0
      %p98 = por %p96, %p97
      %p99 = scmp.ne.s32.totalorder %s87, %s88
      %p100 = scmp.eq.s32.totalorder %s22, 1
      %p101 = por %p99, %p100
      %p103 = scmp.ne.s32.totalorder %s88, %s102
      %p104 = scmp.eq.s32.totalorder %s22, 0
      %p105 = por %p103, %p104
      %s106 = ssub.s32 %s23, %s35
      %s107 = ssub.s32 %s24, %s31
      %s108 = sor.u32 %s106, %s107
      %p109 = scmp.eq.s32.totalorder %s108, 0
      %s111 = sadd.s32 %s110, 1
      %s112 = scalar_select %p109, %s110, %s111
      %p115 = pneg %p109
      %p116 = scmp.eq.s32.totalorder %s16, 1
      %p117 = por %p115, %p116
      %p118 = scmp.ne.s32.totalorder %s110, %s113
      %p119 = scmp.eq.s32.totalorder %s16, 0
      %p120 = por %p118, %p119
      %p121 = scmp.ne.s32.totalorder %s110, %s113
      %p122 = scmp.eq.s32.totalorder %s21, 1
      %p123 = por %p121, %p122
      %p124 = scmp.ne.s32.totalorder %s113, %s114
      %p125 = scmp.eq.s32.totalorder %s21, 0
      %p126 = por %p124, %p125
      %p127 = scmp.ne.s32.totalorder %s113, %s114
      %p128 = scmp.eq.s32.totalorder %s22, 1
      %p129 = por %p127, %p128
      %p131 = scmp.ne.s32.totalorder %s114, %s130
      %p132 = scmp.eq.s32.totalorder %s22, 0
      %p133 = por %p131, %p132
      %p134 = scmp.le.s32.totalorder 1, %s16
      %p135 = scmp.lt.s32.totalorder %s16, 3
      %p136 = pnand %p134, %p135
      %p137 = pneg %p136
      // Predicated region
      $region9: #{tpu_custom_call.1} parent=5 // pred_check
        _
      $region10: #{tpu_custom_call.1} parent=5 // pred_check_branch
        %139 = sbr.rel (%p136) target = $region12
      $region11: #{tpu_custom_call.1} parent=5 // pred_region
        %s140 = ssub.s32 %s16, 1
        // Predicated region
        $region13: #{tpu_custom_call.1} parent=11 // pred_check
          %p141 = pneg %p77
        $region14: #{tpu_custom_call.1} parent=11 // pred_check_branch
          %143 = sbr.rel (%p141) target = $region16
        $region15: #{tpu_custom_call.1} parent=11 // pred_region
          %s145 = ssub.s32 256, 256
          %146 = vsyncadd [#allocation6], %s145
          %s147 = sshll.u32 [#allocation5], 4
          %s148 = int_to_ptr.vmem [resolvable:$true] %s147
          %153 = dma.hbm_to_vmem [thread:$0]  %s1, 256, %s148, [#allocation6], 64, 64, 4
        $region16: #{tpu_custom_call.1} parent=11 // pred_fallthru
          _
        // Predicated region
        $region17: #{tpu_custom_call.1} parent=11 // pred_check
          %p154 = pneg %p98
        $region18: #{tpu_custom_call.1} parent=11 // pred_check_branch
          %156 = sbr.rel (%p154) target = $region20
        $region19: #{tpu_custom_call.1} parent=11 // pred_region
          _
        $region20: #{tpu_custom_call.1} parent=11 // pred_fallthru
          _
      $region12: #{tpu_custom_call.1} parent=5 // pred_fallthru
        _
      %p157 = scmp.lt.s32.totalorder %s16, 2
      // Predicated region
      $region21: #{tpu_custom_call.1} parent=5 // pred_check
        %p158 = pneg %p157
      $region22: #{tpu_custom_call.1} parent=5 // pred_check_branch
        %160 = sbr.rel (%p158) target = $region24
      $region23: #{tpu_custom_call.1} parent=5 // pred_region
        // Predicated region
        $region25: #{tpu_custom_call.1} parent=23 // pred_check
          %p161 = pneg %p50
        $region26: #{tpu_custom_call.1} parent=23 // pred_check_branch
          %163 = sbr.rel (%p161) target = $region28
        $region27: #{tpu_custom_call.1} parent=23 // pred_region
          %s164 = sand.u32 %s40, 1
          %s165 = scalar_lea.sflag [#allocation3], %s164
          %s166 = sand.u32 %s40, 1
          %s167 = smul.addr %s166, 64
          %s168 = scalar_lea.vmem [#allocation2], %s167
          %s169 = smul.u32 2, %s24
          %s171 = ssub.s32 1024, 1024
          %172 = vsyncadd %s165, %s171
          %s173 = smul.addr %s23, 8
          %s174 = sadd.s32 %s169, %s173
          %s175 = smul.addr %s174, 128
          %s176 = scalar_lea.hbm %s0, %s175
          %s177 = sshll.u32 %s168, 4
          %s178 = int_to_ptr.vmem [resolvable:$true] %s177
          %183 = dma.hbm_to_vmem [thread:$0]  %s176, 1024, %s178, %s165, 256, 256, 16
        $region28: #{tpu_custom_call.1} parent=23 // pred_fallthru
          _
      $region24: #{tpu_custom_call.1} parent=5 // pred_fallthru
        _
      %p184 = scmp.le.s32.totalorder 1, %s16
      %p185 = scmp.lt.s32.totalorder %s16, 3
      %p186 = pnand %p184, %p185
      %p187 = pneg %p186
      // Predicated region
      $region29: #{tpu_custom_call.1} parent=5 // pred_check
        _
      $region30: #{tpu_custom_call.1} parent=5 // pred_check_branch
        %189 = sbr.rel (%p186) target = $region32
      $region31: #{tpu_custom_call.1} parent=5 // pred_region
        %s190 = ssub.s32 %s16, 1
        %s191 = sand.u32 %s43, 1
        %s192 = scalar_lea.sflag [#allocation3], %s191
        %s193 = sand.u32 %s43, 1
        %s194 = smul.addr %s193, 64
        %s195 = scalar_lea.vmem [#allocation2], %s194
        // Predicated region
        $region33: #{tpu_custom_call.1} parent=31 // pred_check
          %p196 = pneg %p56
        $region34: #{tpu_custom_call.1} parent=31 // pred_check_branch
          %198 = sbr.rel (%p196) target = $region36
        $region35: #{tpu_custom_call.1} parent=31 // pred_region
          %199 = dma.done %s192, 1024
        $region36: #{tpu_custom_call.1} parent=31 // pred_fallthru
          _
        // Predicated region
        $region37: #{tpu_custom_call.1} parent=31 // pred_check
          %p200 = pneg %p77
        $region38: #{tpu_custom_call.1} parent=31 // pred_check_branch
          %202 = sbr.rel (%p200) target = $region40
        $region39: #{tpu_custom_call.1} parent=31 // pred_region
          %203 = dma.done [#allocation6], 256
        $region40: #{tpu_custom_call.1} parent=31 // pred_fallthru
          _
        %s204 = sand.u32 %s43, 1
        %s205 = scalar_lea.sflag [#allocation3], %s204
        %s206 = sand.u32 %s43, 1
        %s207 = smul.addr %s206, 64
        %s208 = scalar_lea.vmem [#allocation2], %s207
        %p209 = pneg %p56
        %p210 = pneg %p53
        %p211 = pneg %p77
        %p212 = pneg %p74
        %p213 = pneg %p98
        %p214 = pneg %p95
        %p215 = pneg %p126
        %p216 = pneg %p123
        %s217 = sand.u32 %s113, 1
        %s218 = scalar_lea.sflag [#allocation4], %s217
        %s219 = sand.u32 %s113, 1
        %s220 = smul.addr %s219, 256
        %s221 = scalar_lea.vmem [#allocation7], %s220
        %s222 = smul.u32 2, %s26
        %s223 = smul.u32 32, %s26
        %v225 = vld [vmem:[%s195] sm:$0xff]
        %v226 = vld [vmem:[%s195 + $0x8] sm:$0xff]
        %v227 = vld [vmem:[%s195 + $0x10] sm:$0xff]
        %v228 = vld [vmem:[%s195 + $0x18] sm:$0xff]
        %v229 = vld [vmem:[%s195 + $0x20] sm:$0xff]
        %v230 = vld [vmem:[%s195 + $0x28] sm:$0xff]
        %v231 = vld [vmem:[%s195 + $0x30] sm:$0xff]
        %v232 = vld [vmem:[%s195 + $0x38] sm:$0xff]
        %v233 = vpack.c.bf16 %v227, %v225
        %v234 = vpack.c.bf16 %v228, %v226
        %v235 = vpack.c.bf16 %v231, %v229
        %v236 = vpack.c.bf16 %v232, %v230
        %v237 = vld [vmem:[#allocation5] sm:$0xf]
        %v238 = vld [vmem:[#allocation5 + $0x4] sm:$0xf]
        %v239 = vld [vmem:[#allocation5 + $0x8] sm:$0xf]
        %v240 = vld [vmem:[#allocation5 + $0xc] sm:$0xf]
        %v241 = vld [vmem:[%s2] sm:$0x1]
        %v243 = vlaneseq
        %v244 = vshrl.u32 %v243, 7
        %v245 = vsub.s32 0, %v244
        %v246 = vrot.slane %v241, %v245
        %248 = vxpose.xlu0.c.b16.start [1/8] %v233, 128
        %249 = vxpose.xlu0.c.b16.cont [2/8] %v235, 128
        %250 = vxpose.xlu0.c.b16.cont [3/8] 0, 128
        %251 = vxpose.xlu0.c.b16.cont [4/8] 0, 128
        %252 = vxpose.xlu0.c.b16.cont [5/8] 0, 128
        %253 = vxpose.xlu0.c.b16.cont [6/8] 0, 128
        %254 = vxpose.xlu0.c.b16.cont [7/8] 0, 128
        %255 = vxpose.xlu0.c.b16.end [8/8] 0, 128
        %v256 = vpop.trf.xlu0
        %v257 = vpop.trf.xlu0
        %v258 = vpop.trf.xlu0
        %v259 = vpop.trf.xlu0
        %v260 = vpop.trf.xlu0
        %v261 = vpop.trf.xlu0
        %v262 = vpop.trf.xlu0
        %v263 = vpop.trf.xlu0
        %264 = vxpose.xlu0.c.b16.start [1/8] %v234, 128
        %265 = vxpose.xlu0.c.b16.cont [2/8] %v236, 128
        %266 = vxpose.xlu0.c.b16.cont [3/8] 0, 128
        %267 = vxpose.xlu0.c.b16.cont [4/8] 0, 128
        %268 = vxpose.xlu0.c.b16.cont [5/8] 0, 128
        %269 = vxpose.xlu0.c.b16.cont [6/8] 0, 128
        %270 = vxpose.xlu0.c.b16.cont [7/8] 0, 128
        %271 = vxpose.xlu0.c.b16.end [8/8] 0, 128
        %v272 = vpop.trf.xlu0
        %v273 = vpop.trf.xlu0
        %v274 = vpop.trf.xlu0
        %v275 = vpop.trf.xlu0
        %v276 = vpop.trf.xlu0
        %v277 = vpop.trf.xlu0
        %v278 = vpop.trf.xlu0
        %v279 = vpop.trf.xlu0
        %v284 = vunpack.c.l.b16 %v237
        %v285 = vunpack.c.l.b16 %v238
        %v286 = vunpack.c.l.b16 %v239
        %v287 = vunpack.c.l.b16 %v240
        %v288 = vpack.c.b16 %v285, %v284
        %v289 = vpack.c.b16 %v287, %v286
        %vm292 = vcmask 261120
        %v294 = vsel %vm292, %v256, 0
        %v297 = vsel %vm292, %v257, 0
        %v300 = vsel %vm292, %v258, 0
        %v303 = vsel %vm292, %v259, 0
        %v306 = vsel %vm292, %v260, 0
        %v309 = vsel %vm292, %v261, 0
        %v312 = vsel %vm292, %v262, 0
        %v315 = vsel %vm292, %v263, 0
        %v318 = vsel %vm292, %v272, 0
        %v321 = vsel %vm292, %v273, 0
        %v324 = vsel %vm292, %v274, 0
        %v327 = vsel %vm292, %v275, 0
        %v330 = vsel %vm292, %v276, 0
        %v333 = vsel %vm292, %v277, 0
        %v336 = vsel %vm292, %v278, 0
        %v339 = vsel %vm292, %v279, 0
        %341 = vmatprep.subr.bf16.mxu0 0
        %342 = vmatpush1.bf16.msra.mxu0 0
        %343 = vmatprep.subr.bf16.mxu0 0
        %344 = vmatpush1.bf16.msra.mxu0 0
        %345 = vmatprep.subr.bf16.mxu0 0
        %346 = vmatpush1.bf16.msra.mxu0 0
        %347 = vmatprep.subr.bf16.mxu0 0
        %348 = vmatpush1.bf16.msra.mxu0 0
        %349 = vmatprep.subr.bf16.mxu0 0
        %350 = vmatpush1.bf16.msra.mxu0 0
        %351 = vmatprep.subr.bf16.mxu0 0
        %352 = vmatpush1.bf16.msra.mxu0 0
        %353 = vmatprep.subr.bf16.mxu0 0
        %354 = vmatpush1.bf16.msra.mxu0 %v289
        %355 = vmatprep.subr.bf16.mxu0 0
        %356 = vmatpush1.bf16.msra.mxu0 %v288
        %357 = vmatprep.subr.bf16.mxu0 0
        %358 = vmatpush2.bf16.msra.mxu0 0
        %359 = vmatprep.subr.bf16.mxu0 0
        %360 = vmatpush2.bf16.msra.mxu0 0
        %361 = vmatprep.subr.bf16.mxu0 0
        %362 = vmatpush2.bf16.msra.mxu0 0
        %363 = vmatprep.subr.bf16.mxu0 0
        %364 = vmatpush2.bf16.msra.mxu0 0
        %365 = vmatprep.subr.bf16.mxu0 0
        %366 = vmatpush2.bf16.msra.mxu0 0
        %367 = vmatprep.subr.bf16.mxu0 0
        %368 = vmatpush2.bf16.msra.mxu0 0
        %369 = vmatprep.subr.bf16.mxu0 0
        %370 = vmatpush2.bf16.msra.mxu0 0
        %371 = vmatprep.subr.bf16.mxu0 0
        %372 = vmatpush2.bf16.msra.mxu0 0
        %373 = vmatprep.mubr.bf16.mxu0 0
        %374 = vmatmul.mubr.bf16.gmra.mxu0 %v294
        %v375 = vpop.f32.mrf.mxu0
        %v376 = vadd.f32 %v246, %v375
        %v377 = vpop.f32.mrf.mxu0
        %v378 = vpop.f32.mrf.mxu0
        %v379 = vadd.f32 %v246, %v378
        %v380 = vpop.f32.mrf.mxu0
        %381 = vmatprep.mubr.bf16.mxu0 0
        %382 = vmatmul.mubr.bf16.gmra.mxu0 %v297
        %v383 = vpop.f32.mrf.mxu0
        %v384 = vadd.f32 %v246, %v383
        %v385 = vpop.f32.mrf.mxu0
        %v386 = vpop.f32.mrf.mxu0
        %v387 = vadd.f32 %v246, %v386
        %v388 = vpop.f32.mrf.mxu0
        %389 = vmatprep.mubr.bf16.mxu0 0
        %390 = vmatmul.mubr.bf16.gmra.mxu0 %v300
        %v391 = vpop.f32.mrf.mxu0
        %v392 = vadd.f32 %v246, %v391
        %v393 = vpop.f32.mrf.mxu0
        %v394 = vpop.f32.mrf.mxu0
        %v395 = vadd.f32 %v246, %v394
        %v396 = vpop.f32.mrf.mxu0
        %397 = vmatprep.mubr.bf16.mxu0 0
        %398 = vmatmul.mubr.bf16.gmra.mxu0 %v303
        %v399 = vpop.f32.mrf.mxu0
        %v400 = vadd.f32 %v246, %v399
        %v401 = vpop.f32.mrf.mxu0
        %v402 = vpop.f32.mrf.mxu0
        %v403 = vadd.f32 %v246, %v402
        %v404 = vpop.f32.mrf.mxu0
        %405 = vmatprep.mubr.bf16.mxu0 0
        %406 = vmatmul.mubr.bf16.gmra.mxu0 %v306
        %v407 = vpop.f32.mrf.mxu0
        %v408 = vadd.f32 %v246, %v407
        %v409 = vpop.f32.mrf.mxu0
        %v410 = vpop.f32.mrf.mxu0
        %v411 = vadd.f32 %v246, %v410
        %v412 = vpop.f32.mrf.mxu0
        %413 = vmatprep.mubr.bf16.mxu0 0
        %414 = vmatmul.mubr.bf16.gmra.mxu0 %v309
        %v415 = vpop.f32.mrf.mxu0
        %v416 = vadd.f32 %v246, %v415
        %v417 = vpop.f32.mrf.mxu0
        %v418 = vpop.f32.mrf.mxu0
        %v419 = vadd.f32 %v246, %v418
        %v420 = vpop.f32.mrf.mxu0
        %421 = vmatprep.mubr.bf16.mxu0 0
        %422 = vmatmul.mubr.bf16.gmra.mxu0 %v312
        %v423 = vpop.f32.mrf.mxu0
        %v424 = vadd.f32 %v246, %v423
        %v425 = vpop.f32.mrf.mxu0
        %v426 = vpop.f32.mrf.mxu0
        %v427 = vadd.f32 %v246, %v426
        %v428 = vpop.f32.mrf.mxu0
        %429 = vmatprep.mubr.bf16.mxu0 0
        %430 = vmatmul.mubr.bf16.gmra.mxu0 %v315
        %v431 = vpop.f32.mrf.mxu0
        %v432 = vadd.f32 %v246, %v431
        %v433 = vpop.f32.mrf.mxu0
        %v434 = vpop.f32.mrf.mxu0
        %v435 = vadd.f32 %v246, %v434
        %v436 = vpop.f32.mrf.mxu0
        %437 = vmatprep.mubr.bf16.mxu0 0
        %438 = vmatmul.mubr.bf16.gmra.mxu0 %v318
        %v439 = vpop.f32.mrf.mxu0
        %v440 = vadd.f32 %v246, %v439
        %v441 = vpop.f32.mrf.mxu0
        %v442 = vpop.f32.mrf.mxu0
        %v443 = vadd.f32 %v246, %v442
        %v444 = vpop.f32.mrf.mxu0
        %445 = vmatprep.mubr.bf16.mxu0 0
        %446 = vmatmul.mubr.bf16.gmra.mxu0 %v321
        %v447 = vpop.f32.mrf.mxu0
        %v448 = vadd.f32 %v246, %v447
        %v449 = vpop.f32.mrf.mxu0
        %v450 = vpop.f32.mrf.mxu0
        %v451 = vadd.f32 %v246, %v450
        %v452 = vpop.f32.mrf.mxu0
        %453 = vmatprep.mubr.bf16.mxu0 0
        %454 = vmatmul.mubr.bf16.gmra.mxu0 %v324
        %v455 = vpop.f32.mrf.mxu0
        %v456 = vadd.f32 %v246, %v455
        %v457 = vpop.f32.mrf.mxu0
        %v458 = vpop.f32.mrf.mxu0
        %v459 = vadd.f32 %v246, %v458
        %v460 = vpop.f32.mrf.mxu0
        %461 = vmatprep.mubr.bf16.mxu0 0
        %462 = vmatmul.mubr.bf16.gmra.mxu0 %v327
        %v463 = vpop.f32.mrf.mxu0
        %v464 = vadd.f32 %v246, %v463
        %v465 = vpop.f32.mrf.mxu0
        %v466 = vpop.f32.mrf.mxu0
        %v467 = vadd.f32 %v246, %v466
        %v468 = vpop.f32.mrf.mxu0
        %469 = vmatprep.mubr.bf16.mxu0 0
        %470 = vmatmul.mubr.bf16.gmra.mxu0 %v330
        %v471 = vpop.f32.mrf.mxu0
        %v472 = vadd.f32 %v246, %v471
        %v473 = vpop.f32.mrf.mxu0
        %v474 = vpop.f32.mrf.mxu0
        %v475 = vadd.f32 %v246, %v474
        %v476 = vpop.f32.mrf.mxu0
        %477 = vmatprep.mubr.bf16.mxu0 0
        %478 = vmatmul.mubr.bf16.gmra.mxu0 %v333
        %v479 = vpop.f32.mrf.mxu0
        %v480 = vadd.f32 %v246, %v479
        %v481 = vpop.f32.mrf.mxu0
        %v482 = vpop.f32.mrf.mxu0
        %v483 = vadd.f32 %v246, %v482
        %v484 = vpop.f32.mrf.mxu0
        %485 = vmatprep.mubr.bf16.mxu0 0
        %486 = vmatmul.mubr.bf16.gmra.mxu0 %v336
        %v487 = vpop.f32.mrf.mxu0
        %v488 = vadd.f32 %v246, %v487
        %v489 = vpop.f32.mrf.mxu0
        %v490 = vpop.f32.mrf.mxu0
        %v491 = vadd.f32 %v246, %v490
        %v492 = vpop.f32.mrf.mxu0
        %493 = vmatprep.mubr.bf16.mxu0 0
        %494 = vmatmul.mubr.bf16.gmra.mxu0 %v339
        %v495 = vpop.f32.mrf.mxu0
        %v496 = vadd.f32 %v246, %v495
        %v497 = vpop.f32.mrf.mxu0
        %v498 = vpop.f32.mrf.mxu0
        %v499 = vadd.f32 %v246, %v498
        %v500 = vpop.f32.mrf.mxu0
        %501 = vdwg.mxu0
        %502 = vst [vmem:[%s221] sm:$0xff] %v376
        %503 = vst [vmem:[%s221 + $0x8] sm:$0xff] %v379
        %504 = vst [vmem:[%s221 + $0x10] sm:$0xff] %v384
        %505 = vst [vmem:[%s221 + $0x18] sm:$0xff] %v387
        %506 = vst [vmem:[%s221 + $0x20] sm:$0xff] %v392
        %507 = vst [vmem:[%s221 + $0x28] sm:$0xff] %v395
        %508 = vst [vmem:[%s221 + $0x30] sm:$0xff] %v400
        %509 = vst [vmem:[%s221 + $0x38] sm:$0xff] %v403
        %510 = vst [vmem:[%s221 + $0x40] sm:$0xff] %v408
        %511 = vst [vmem:[%s221 + $0x48] sm:$0xff] %v411
        %512 = vst [vmem:[%s221 + $0x50] sm:$0xff] %v416
        %513 = vst [vmem:[%s221 + $0x58] sm:$0xff] %v419
        %514 = vst [vmem:[%s221 + $0x60] sm:$0xff] %v424
        %515 = vst [vmem:[%s221 + $0x68] sm:$0xff] %v427
        %516 = vst [vmem:[%s221 + $0x70] sm:$0xff] %v432
        %517 = vst [vmem:[%s221 + $0x78] sm:$0xff] %v435
        %518 = vst [vmem:[%s221 + $0x80] sm:$0xff] %v440
        %519 = vst [vmem:[%s221 + $0x88] sm:$0xff] %v443
        %520 = vst [vmem:[%s221 + $0x90] sm:$0xff] %v448
        %521 = vst [vmem:[%s221 + $0x98] sm:$0xff] %v451
        %522 = vst [vmem:[%s221 + $0xa0] sm:$0xff] %v456
        %523 = vst [vmem:[%s221 + $0xa8] sm:$0xff] %v459
        %524 = vst [vmem:[%s221 + $0xb0] sm:$0xff] %v464
        %525 = vst [vmem:[%s221 + $0xb8] sm:$0xff] %v467
        %526 = vst [vmem:[%s221 + $0xc0] sm:$0xff] %v472
        %527 = vst [vmem:[%s221 + $0xc8] sm:$0xff] %v475
        %528 = vst [vmem:[%s221 + $0xd0] sm:$0xff] %v480
        %529 = vst [vmem:[%s221 + $0xd8] sm:$0xff] %v483
        %530 = vst [vmem:[%s221 + $0xe0] sm:$0xff] %v488
        %531 = vst [vmem:[%s221 + $0xe8] sm:$0xff] %v491
        %532 = vst [vmem:[%s221 + $0xf0] sm:$0xff] %v496
        %533 = vst [vmem:[%s221 + $0xf8] sm:$0xff] %v499
        %s534 = sand.u32 %s113, 1
        %s535 = scalar_lea.sflag [#allocation4], %s534
        %s536 = sand.u32 %s113, 1
        %s537 = smul.addr %s536, 256
        %s538 = scalar_lea.vmem [#allocation7], %s537
        // Predicated region
        $region41: #{tpu_custom_call.1} parent=31 // pred_check
          %p539 = pneg %p123
        $region42: #{tpu_custom_call.1} parent=31 // pred_check_branch
          %541 = sbr.rel (%p539) target = $region44
        $region43: #{tpu_custom_call.1} parent=31 // pred_region
          %s542 = smul.u32 32, %s26
          %s544 = ssub.s32 4096, 4096
          %545 = vsyncadd %s535, %s544
          %s546 = smul.addr %s25, 32
          %s547 = sadd.s32 %s542, %s546
          %s548 = smul.addr %s547, 128
          %s549 = scalar_lea.hbm %s3, %s548
          %s550 = sshll.u32 %s538, 4
          %s551 = int_to_ptr.vmem [resolvable:$true] %s550
          %556 = dma.vmem_to_hbm [thread:$0]  %s551, 4096, %s549, %s535, 128, 128, 8
        $region44: #{tpu_custom_call.1} parent=31 // pred_fallthru
          _
      $region32: #{tpu_custom_call.1} parent=5 // pred_fallthru
        _
      %p557 = scmp.le.s32.totalorder 2, %s16
      // Predicated region
      $region45: #{tpu_custom_call.1} parent=5 // pred_check
        %p558 = pneg %p557
      $region46: #{tpu_custom_call.1} parent=5 // pred_check_branch
        %560 = sbr.rel (%p558) target = $region48
      $region47: #{tpu_custom_call.1} parent=5 // pred_region
        %s561 = ssub.s32 %s16, 2
        // Predicated region
        $region49: #{tpu_custom_call.1} parent=47 // pred_check
          %p562 = pneg %p129
        $region50: #{tpu_custom_call.1} parent=47 // pred_check_branch
          %564 = sbr.rel (%p562) target = $region52
        $region51: #{tpu_custom_call.1} parent=47 // pred_region
          %s565 = sand.u32 %s114, 1
          %s566 = scalar_lea.sflag [#allocation4], %s565
          %s567 = sand.u32 %s114, 1
          %s568 = smul.addr %s567, 256
          %s569 = scalar_lea.vmem [#allocation7], %s568
          %570 = dma.done %s566, 4096
        $region52: #{tpu_custom_call.1} parent=47 // pred_fallthru
          _
      $region48: #{tpu_custom_call.1} parent=5 // pred_fallthru
        _
    $region6: #{tpu_custom_call.1} parent=1 // loop_footer
      %s20 = sadd.s32 1, %s16
    $region7: #{tpu_custom_call.1} parent=1 // loop_footer_branch
      %15 = sbr.rel target = $region3
    $region8: #{tpu_custom_call.1} parent=1 // loop_exit
      _
    %571 = vsyncpa [#allocation3], 1
    %s572 = scalar_lea.sflag [#allocation3], 1
    %573 = vsyncpa %s572, 1
    %574 = vsyncpa [#allocation6], 1
    %575 = vsyncpa [#allocation4], 1
    %s576 = scalar_lea.sflag [#allocation4], 1
    %577 = vsyncpa %s576, 1

</llo_original>
